<compile_context>
chip_gen: v7x
topology: tpu7x:2x2x1
jax: 0.10.0
libtpu: 0.0.40
codegen_flags: <defaults>
</compile_context>

<pallas_src>
import functools

import jax
import jax.numpy as jnp
from jax.experimental import pallas as pl
from jax.experimental.pallas import tpu as pltpu


def _round_up(n, m):
    return ((n + m - 1) // m) * m


def cond_linear_kernel(y_ref, x_ref, w_ref, b_ref, emb_ref, o_ref, *, fold, nl_pad,
                       num_levels):
    """One batch tile of the fused (batch-folded) linear + conditional scaling.

    y_ref   : (TBf, fold)              int32    -- level index per original row
    x_ref   : (TBf, fold*num_in)       f32/bf16 -- `fold` original rows per folded row
    w_ref   : (fold*num_in, n_lanes)   f32/bf16 -- block-diagonal W^T (resident)
    b_ref   : (1, n_lanes)             f32      -- bias tiled `fold` times (resident)
    emb_ref : (fold*nl_pad, n_lanes)   f32      -- block-diagonal embedding (resident)
    o_ref   : (TBf, n_lanes)           f32
    """
    # Main linear layer on the MXU (K = fold*num_in), f32 accumulation.
    out = jnp.dot(x_ref[...], w_ref[...], preferred_element_type=jnp.float32)
    out = out + b_ref[...]

    # Embedding gather as one block-diagonal one-hot matmul: the one-hot is built on
    # the VPU (iota + compare), the gather rides the otherwise idle MXU.  Out-of-range
    # y matches no column -> gamma == 0 for that row.
    tb = y_ref.shape[0]
    cols = fold * nl_pad
    col = jax.lax.broadcasted_iota(jnp.int32, (tb, cols), 1)
    onehot = jnp.zeros((tb, cols), jnp.float32)
    for j in range(fold):  # fold is a small static constant (e.g. 4)
        yj = y_ref[:, j:j + 1]
        ok = (yj >= 0) & (yj < num_levels)
        tgt = jnp.where(ok, yj + j * nl_pad, -1)
        onehot = onehot + (col == tgt).astype(jnp.float32)
    gamma = jnp.dot(onehot, emb_ref[...], preferred_element_type=jnp.float32)

    o_ref[...] = (gamma * out).astype(o_ref.dtype)


@functools.partial(jax.jit, static_argnames=("tb",))
def conditional_linear(x, y, w, b, embed_w, *, tb=2048):
    """out = embed_w[y] * (x @ w.T + b); w in PyTorch (num_out, num_in) layout."""
    B, num_in = x.shape
    num_out = w.shape[0]
    num_levels = embed_w.shape[0]

    # Batch-fold factor: pack `fold` rows into the 128-lane axis when num_out divides
    # 128, making the output writeback lane-dense (no padding, no post-kernel slice).
    fold = 128 // num_out if (num_out < 128 and 128 % num_out == 0) else 1
    n_lanes = _round_up(fold * num_out, 128)
    nl_pad = _round_up(num_levels, 8)

    cdt = x.dtype                                      # MXU operand dtype follows x
    sub = {4: 8, 2: 16, 1: 32}.get(cdt.itemsize, 8)    # sublane tile for that dtype

    # Fold the batch.  Pad only when B is not a multiple of `fold` (small remainder);
    # common batch sizes skip this entirely.
    B_r = _round_up(B, fold)
    if B_r != B:
        x = jnp.pad(x, ((0, B_r - B), (0, 0)))
        y = jnp.pad(y, (0, B_r - B))
    Bf = B_r // fold
    xf = x.reshape(Bf, fold * num_in)                  # free row-major relabel
    yf = y.astype(jnp.int32).reshape(Bf, fold)

    # Resident parameter blocks (tiny; zero padding is exact).
    eye = jnp.eye(fold, dtype=jnp.float32)
    w_blk = jnp.kron(eye, w.T.astype(jnp.float32))                       # block-diag W^T
    w_blk = jnp.pad(w_blk, ((0, 0), (0, n_lanes - fold * num_out))).astype(cdt)
    b_blk = jnp.pad(jnp.tile(b.astype(jnp.float32), fold),
                    (0, n_lanes - fold * num_out)).reshape(1, n_lanes)
    emb_p = jnp.pad(embed_w.astype(jnp.float32), ((0, nl_pad - num_levels), (0, 0)))
    emb_blk = jnp.pad(jnp.kron(eye, emb_p), ((0, 0), (0, n_lanes - fold * num_out)))

    # Batch tile (in folded rows): large to amortize per-step overhead, sublane
    # aligned for the compute dtype, and capped so the grid keeps >= 2 steps where
    # possible (v7x megacore sharding of the "parallel" axis).
    tbf = _round_up(max(1, min(tb, B_r) // fold), sub)
    two_step_cap = _round_up(max(1, (Bf + 1) // 2), sub)
    tbf = max(sub, min(tbf, two_step_cap))
    grid = (pl.cdiv(Bf, tbf),)                         # ragged last block clipped by Pallas

    kernel = functools.partial(cond_linear_kernel, fold=fold, nl_pad=nl_pad,
                               num_levels=num_levels)
    out = pl.pallas_call(
        kernel,
        out_shape=jax.ShapeDtypeStruct((Bf, n_lanes), jnp.float32),
        grid_spec=pltpu.PrefetchScalarGridSpec(
            num_scalar_prefetch=0,
            grid=grid,
            in_specs=[
                pl.BlockSpec((tbf, fold), lambda i: (i, 0)),               # y (per tile)
                pl.BlockSpec((tbf, fold * num_in), lambda i: (i, 0)),      # x (per tile)
                pl.BlockSpec((fold * num_in, n_lanes), lambda i: (0, 0)),  # W blockdiag (resident)
                pl.BlockSpec((1, n_lanes), lambda i: (0, 0)),              # bias (resident)
                pl.BlockSpec((fold * nl_pad, n_lanes), lambda i: (0, 0)),  # embed blockdiag (resident)
            ],
            out_specs=pl.BlockSpec((tbf, n_lanes), lambda i: (i, 0)),
        ),
        compiler_params=pltpu.CompilerParams(
            dimension_semantics=("parallel",),
        ),
    )(yf, xf, w_blk, b_blk, emb_blk)

    # Unfold.  The lane slice is a no-op when fold*num_out == n_lanes (the lane-dense
    # case); the row slice is a no-op when B % fold == 0.
    out = out[:, : fold * num_out].reshape(B_r, num_out)
    return out[:B] if B_r != B else out


if __name__ == "__main__":
    num_in, num_out, num_levels = 32, 32, 10
    B = 64

    key = jax.random.PRNGKey(0)
    kx, ky, kw, kb, ke = jax.random.split(key, 5)

    x = jax.random.normal(kx, (B, num_in), dtype=jnp.float32)
    y = jax.random.randint(ky, (B,), 0, num_levels, dtype=jnp.int32)

    # Parameters (PyTorch layouts: nn.Linear default init + uniform embedding).
    bound = 1.0 / float(num_in) ** 0.5
    w = jax.random.uniform(kw, (num_out, num_in), jnp.float32, -bound, bound)
    b = jax.random.uniform(kb, (num_out,), jnp.float32, -bound, bound)
    embed_w = jax.random.uniform(ke, (num_levels, num_out), jnp.float32, 0.0, 1.0)

    # Pure-JAX reference of the PyTorch forward.
    ref = embed_w[y] * (x @ w.T + b)

    # f32 path with a small batch tile to exercise a multi-step grid + resident params.
    out = jax.block_until_ready(conditional_linear(x, y, w, b, embed_w, tb=32))
    assert out.shape == (B, num_out)
    assert jnp.allclose(out, ref, atol=1e-5, rtol=1e-5), "f32 mismatch vs reference"

    # Ragged batch (not a multiple of the fold factor or the batch tile).
    Br = 13
    out_r = jax.block_until_ready(
        conditional_linear(x[:Br], y[:Br], w, b, embed_w, tb=32)
    )
    assert out_r.shape == (Br, num_out)
    assert jnp.allclose(out_r, ref[:Br], atol=1e-5, rtol=1e-5), "ragged mismatch"

    # bf16 x upstream -> bf16 MXU operands with f32 accumulation (no wrapper cast pass).
    out_bf16 = jax.block_until_ready(
        conditional_linear(x.astype(jnp.bfloat16), y, w, b, embed_w)
    )
    assert out_bf16.shape == (B, num_out)
    assert jnp.allclose(out_bf16, ref, atol=3e-2, rtol=3e-2), "bf16 mismatch vs reference"

    print("KERNEL_OK")
</pallas_src>

<mosaic_0001>
module attributes {stable_mosaic.version = 11 : i64} {
  func.func @cond_linear_kernel(%arg0: i32, %arg1: memref<8x4xi32, #tpu.memory_space<vmem>>, %arg2: memref<8x128xf32, #tpu.memory_space<vmem>>, %arg3: memref<128x128xf32, #tpu.memory_space<vmem>>, %arg4: memref<1x128xf32, #tpu.memory_space<vmem>>, %arg5: memref<64x128xf32, #tpu.memory_space<vmem>>, %arg6: memref<8x128xf32, #tpu.memory_space<vmem>>) attributes {dimension_semantics = [#tpu.dimension_semantics<parallel>], iteration_bounds = array<i64: 2>, scalar_prefetch = 0 : i64, scratch_operands = 0 : i64, tpu.core_type = #tpu.core_type<tc>, window_params = [{transform_indices = @transform_0, window_bounds = array<i64: 8, 4>}, {transform_indices = @transform_1, window_bounds = array<i64: 8, 128>}, {pipeline_mode = #tpu.pipeline_mode<synchronous>, transform_indices = @transform_2, window_bounds = array<i64: 128, 128>}, {pipeline_mode = #tpu.pipeline_mode<synchronous>, transform_indices = @transform_3, window_bounds = array<i64: 1, 128>}, {pipeline_mode = #tpu.pipeline_mode<synchronous>, transform_indices = @transform_4, window_bounds = array<i64: 64, 128>}, {transform_indices = @transform_5, window_bounds = array<i64: 8, 128>}]} {
    %c0 = arith.constant 0 : index
    %c0_0 = arith.constant 0 : index
    %0 = vector.load %arg2[%c0, %c0_0] : memref<8x128xf32, #tpu.memory_space<vmem>>, vector<8x128xf32>
    %c0_1 = arith.constant 0 : index
    %c0_2 = arith.constant 0 : index
    %1 = vector.load %arg3[%c0_1, %c0_2] : memref<128x128xf32, #tpu.memory_space<vmem>>, vector<128x128xf32>
    %cst = arith.constant dense<0.000000e+00> : vector<8x128xf32>
    %2 = tpu.matmul %0, %1, %cst {dimension_numbers = #tpu.dot_dimension_numbers<[1], [0], [0], [1], [0, 0, 1, 1], [], []>} : vector<8x128xf32>, vector<128x128xf32>, vector<8x128xf32> -> vector<8x128xf32>
    %c0_3 = arith.constant 0 : index
    %c0_4 = arith.constant 0 : index
    %3 = vector.load %arg4[%c0_3, %c0_4] : memref<1x128xf32, #tpu.memory_space<vmem>>, vector<1x128xf32>
    %4 = vector.broadcast %3 : vector<1x128xf32> to vector<8x128xf32>
    %5 = arith.addf %2, %4 : vector<8x128xf32>
    %6 = tpu.iota {dimensions = array<i32: 1>} : vector<8x64xi32>
    %cst_5 = arith.constant 0.000000e+00 : f32
    %7 = vector.broadcast %cst_5 : f32 to vector<8x64xf32>
    %c0_6 = arith.constant 0 : index
    %c0_7 = arith.constant 0 : index
    %8 = vector.load %arg1[%c0_6, %c0_7] : memref<8x4xi32, #tpu.memory_space<vmem>>, vector<8x1xi32>
    %c0_i32 = arith.constant 0 : i32
    %9 = vector.broadcast %c0_i32 : i32 to vector<8x1xi32>
    %10 = arith.cmpi sge, %8, %9 : vector<8x1xi32>
    %c10_i32 = arith.constant 10 : i32
    %11 = vector.broadcast %c10_i32 : i32 to vector<8x1xi32>
    %12 = arith.cmpi slt, %8, %11 : vector<8x1xi32>
    %13 = arith.andi %10, %12 : vector<8x1xi1>
    %c0_i32_8 = arith.constant 0 : i32
    %14 = vector.broadcast %c0_i32_8 : i32 to vector<8x1xi32>
    %15 = arith.addi %8, %14 : vector<8x1xi32>
    %c-1_i32 = arith.constant -1 : i32
    %16 = vector.broadcast %c-1_i32 : i32 to vector<8x1xi32>
    %17 = arith.select %13, %15, %16 : vector<8x1xi1>, vector<8x1xi32>
    %18 = vector.broadcast %17 : vector<8x1xi32> to vector<8x64xi32>
    %19 = arith.cmpi eq, %6, %18 : vector<8x64xi32>
    %20 = arith.extui %19 : vector<8x64xi1> to vector<8x64xi32>
    %21 = arith.sitofp %20 : vector<8x64xi32> to vector<8x64xf32>
    %22 = arith.addf %7, %21 : vector<8x64xf32>
    %c0_9 = arith.constant 0 : index
    %c1 = arith.constant 1 : index
    %23 = vector.load %arg1[%c0_9, %c1] : memref<8x4xi32, #tpu.memory_space<vmem>>, vector<8x1xi32>
    %c0_i32_10 = arith.constant 0 : i32
    %24 = vector.broadcast %c0_i32_10 : i32 to vector<8x1xi32>
    %25 = arith.cmpi sge, %23, %24 : vector<8x1xi32>
    %c10_i32_11 = arith.constant 10 : i32
    %26 = vector.broadcast %c10_i32_11 : i32 to vector<8x1xi32>
    %27 = arith.cmpi slt, %23, %26 : vector<8x1xi32>
    %28 = arith.andi %25, %27 : vector<8x1xi1>
    %c16_i32 = arith.constant 16 : i32
    %29 = vector.broadcast %c16_i32 : i32 to vector<8x1xi32>
    %30 = arith.addi %23, %29 : vector<8x1xi32>
    %c-1_i32_12 = arith.constant -1 : i32
    %31 = vector.broadcast %c-1_i32_12 : i32 to vector<8x1xi32>
    %32 = arith.select %28, %30, %31 : vector<8x1xi1>, vector<8x1xi32>
    %33 = vector.broadcast %32 : vector<8x1xi32> to vector<8x64xi32>
    %34 = arith.cmpi eq, %6, %33 : vector<8x64xi32>
    %35 = arith.extui %34 : vector<8x64xi1> to vector<8x64xi32>
    %36 = arith.sitofp %35 : vector<8x64xi32> to vector<8x64xf32>
    %37 = arith.addf %22, %36 : vector<8x64xf32>
    %c0_13 = arith.constant 0 : index
    %c2 = arith.constant 2 : index
    %38 = vector.load %arg1[%c0_13, %c2] : memref<8x4xi32, #tpu.memory_space<vmem>>, vector<8x1xi32>
    %c0_i32_14 = arith.constant 0 : i32
    %39 = vector.broadcast %c0_i32_14 : i32 to vector<8x1xi32>
    %40 = arith.cmpi sge, %38, %39 : vector<8x1xi32>
    %c10_i32_15 = arith.constant 10 : i32
    %41 = vector.broadcast %c10_i32_15 : i32 to vector<8x1xi32>
    %42 = arith.cmpi slt, %38, %41 : vector<8x1xi32>
    %43 = arith.andi %40, %42 : vector<8x1xi1>
    %c32_i32 = arith.constant 32 : i32
    %44 = vector.broadcast %c32_i32 : i32 to vector<8x1xi32>
    %45 = arith.addi %38, %44 : vector<8x1xi32>
    %c-1_i32_16 = arith.constant -1 : i32
    %46 = vector.broadcast %c-1_i32_16 : i32 to vector<8x1xi32>
    %47 = arith.select %43, %45, %46 : vector<8x1xi1>, vector<8x1xi32>
    %48 = vector.broadcast %47 : vector<8x1xi32> to vector<8x64xi32>
    %49 = arith.cmpi eq, %6, %48 : vector<8x64xi32>
    %50 = arith.extui %49 : vector<8x64xi1> to vector<8x64xi32>
    %51 = arith.sitofp %50 : vector<8x64xi32> to vector<8x64xf32>
    %52 = arith.addf %37, %51 : vector<8x64xf32>
    %c0_17 = arith.constant 0 : index
    %c3 = arith.constant 3 : index
    %53 = vector.load %arg1[%c0_17, %c3] : memref<8x4xi32, #tpu.memory_space<vmem>>, vector<8x1xi32>
    %c0_i32_18 = arith.constant 0 : i32
    %54 = vector.broadcast %c0_i32_18 : i32 to vector<8x1xi32>
    %55 = arith.cmpi sge, %53, %54 : vector<8x1xi32>
    %c10_i32_19 = arith.constant 10 : i32
    %56 = vector.broadcast %c10_i32_19 : i32 to vector<8x1xi32>
    %57 = arith.cmpi slt, %53, %56 : vector<8x1xi32>
    %58 = arith.andi %55, %57 : vector<8x1xi1>
    %c48_i32 = arith.constant 48 : i32
    %59 = vector.broadcast %c48_i32 : i32 to vector<8x1xi32>
    %60 = arith.addi %53, %59 : vector<8x1xi32>
    %c-1_i32_20 = arith.constant -1 : i32
    %61 = vector.broadcast %c-1_i32_20 : i32 to vector<8x1xi32>
    %62 = arith.select %58, %60, %61 : vector<8x1xi1>, vector<8x1xi32>
    %63 = vector.broadcast %62 : vector<8x1xi32> to vector<8x64xi32>
    %64 = arith.cmpi eq, %6, %63 : vector<8x64xi32>
    %65 = arith.extui %64 : vector<8x64xi1> to vector<8x64xi32>
    %66 = arith.sitofp %65 : vector<8x64xi32> to vector<8x64xf32>
    %67 = arith.addf %52, %66 : vector<8x64xf32>
    %c0_21 = arith.constant 0 : index
    %c0_22 = arith.constant 0 : index
    %68 = vector.load %arg5[%c0_21, %c0_22] : memref<64x128xf32, #tpu.memory_space<vmem>>, vector<64x128xf32>
    %cst_23 = arith.constant dense<0.000000e+00> : vector<8x128xf32>
    %69 = tpu.matmul %67, %68, %cst_23 {dimension_numbers = #tpu.dot_dimension_numbers<[1], [0], [0], [1], [0, 0, 1, 1], [], []>} : vector<8x64xf32>, vector<64x128xf32>, vector<8x128xf32> -> vector<8x128xf32>
    %70 = arith.mulf %69, %5 : vector<8x128xf32>
    %c0_24 = arith.constant 0 : index
    %c0_25 = arith.constant 0 : index
    %71 = vector.load %arg6[%c0_24, %c0_25] : memref<8x128xf32, #tpu.memory_space<vmem>>, vector<8x128xf32>
    tpu.vector_store %arg6[%c0_24, %c0_25], %70 {strides = array<i32>} : memref<8x128xf32, #tpu.memory_space<vmem>>, vector<8x128xf32>,
    return
  }
  func.func @transform_0(%arg0: i32) -> (i32, i32) {
    %c0_i32 = arith.constant 0 : i32
    %c0_i32_0 = arith.constant 0 : i32
    return %arg0, %c0_i32 : i32, i32
  }
  func.func @transform_1(%arg0: i32) -> (i32, i32) {
    %c0_i32 = arith.constant 0 : i32
    %c0_i32_0 = arith.constant 0 : i32
    return %arg0, %c0_i32 : i32, i32
  }
  func.func @transform_2(%arg0: i32) -> (i32, i32) {
    %c0_i32 = arith.constant 0 : i32
    %c0_i32_0 = arith.constant 0 : i32
    %c0_i32_1 = arith.constant 0 : i32
    return %c0_i32, %c0_i32_0 : i32, i32
  }
  func.func @transform_3(%arg0: i32) -> (i32, i32) {
    %c0_i32 = arith.constant 0 : i32
    %c0_i32_0 = arith.constant 0 : i32
    %c0_i32_1 = arith.constant 0 : i32
    return %c0_i32, %c0_i32_0 : i32, i32
  }
  func.func @transform_4(%arg0: i32) -> (i32, i32) {
    %c0_i32 = arith.constant 0 : i32
    %c0_i32_0 = arith.constant 0 : i32
    %c0_i32_1 = arith.constant 0 : i32
    return %c0_i32, %c0_i32_0 : i32, i32
  }
  func.func @transform_5(%arg0: i32) -> (i32, i32) {
    %c0_i32 = arith.constant 0 : i32
    %c0_i32_0 = arith.constant 0 : i32
    return %arg0, %c0_i32 : i32, i32
  }
}

</mosaic_0001>

<llo_original>
// kernel: tile.8
$region0: #{tile.8}
  #allocation0 [shape = 's32[1]{0}', space=sflag, size = 0x4, scoped, tag = 'scoped memory for tile.8']
  %s0 = inlined_call_operand.vmem [shape: f32[32], index: 0, kind: input, shape index: {}]
  %s1 = inlined_call_operand.vmem [shape: f32[4,32], index: 1, kind: output, shape index: {}]
  // Predicated region
  $region2: #{tile.8} parent=0 // pred_check
    _
  $region3: #{tile.8} parent=0 // pred_check_branch
    %3 = sbr.rel (0) target = $region5
  $region4: #{tile.8} parent=0 // pred_region
    _
  $region5: #{tile.8} parent=0 // pred_fallthru
    _
  %v4 = vld [vmem:[%s0] ss:$0 sm:$0xff]
  %5 = vst [vmem:[%s1] sm:$0xf] %v4

// kernel: conditional_linear.1
$region0: #{conditional_linear.1}
  #allocation0 [shape = 'u32[]', space=smem, size = 0x4, offset = 0x4, fixed_abs, tag = 'smem constant byte address 0x4 - core index']
  #allocation1 [shape = 'u32[144,128]{1,0:T(1,128)}', space=vmem, size = 0x12000, scoped, tag = 'internal scratch']
  %s0 = inlined_call_operand.vmem [shape: s32[16,4], index: 0, kind: input, shape index: {}]
  %s1 = inlined_call_operand.vmem [shape: f32[16,128], index: 1, kind: input, shape index: {}]
  %s2 = inlined_call_operand.vmem [shape: f32[128,128], index: 2, kind: input, shape index: {}]
  %s3 = inlined_call_operand.vmem [shape: f32[1,128], index: 3, kind: input, shape index: {}]
  %s4 = inlined_call_operand.vmem [shape: f32[64,128], index: 4, kind: input, shape index: {}]
  %s5 = inlined_call_operand.vmem [shape: f32[16,128], index: 5, kind: output, shape index: {}]
  %s6 = sld [smem:[#allocation0]]
  $region53: #{conditional_linear.1} parent=0
    _
  %s8 = ssub.s32 1, %s6
  %s9 = scalar_select 0, %s8, %s6
  loop: start=0, step=1, limit=4
  $region2: #{conditional_linear.1} parent=0 // loop_pre_header
    _
  $region3: #{conditional_linear.1} parent=0 // loop_header
    %s11 = sphi 0, %s15
    %p12 = scmp.ge.s32.totalorder %s11, 4
    %s21 = sphi 0, %s23
    %s24 = sphi 0, %s21
    %s25 = sphi 0, %s24
    %s41 = sphi 0, %s25
    %s47 = sphi 0, %s49
    %s50 = sphi 0, %s47
    %s51 = sphi 0, %s50
    %s67 = sphi 0, %s51
    %s71 = sphi 0, %s71
    %s73 = sphi 0, %s71
    %s74 = sphi 0, %s73
    %s88 = sphi 0, %s74
    %s92 = sphi 0, %s92
    %s94 = sphi 0, %s92
    %s95 = sphi 0, %s94
    %s109 = sphi 0, %s95
    %s113 = sphi 0, %s113
    %s115 = sphi 0, %s113
    %s116 = sphi 0, %s115
    %s130 = sphi 0, %s116
    %s136 = sphi 0, %s138
    %s139 = sphi 0, %s136
    %s140 = sphi 0, %s139
    %s156 = sphi 0, %s140
  $region4: #{conditional_linear.1} parent=0 // loop_header_branch
    %14 = sbr.rel (%p12) target = $region8
  $region5: #{conditional_linear.1} parent=0 // loop_body
    %s16 = ssub.s32 %s11, 1
    %s17 = ssub.s32 %s11, 2
    %s18 = sadd.s32 %s11, 1
    %s19 = ssub.s32 %s11, %s18
    %p20 = scmp.eq.s32.totalorder %s19, 0
    %s22 = sadd.s32 %s21, 1
    %s23 = scalar_select %p20, %s21, %s22
    %p26 = pneg %p20
    %p27 = scmp.eq.s32.totalorder %s11, 1
    %p28 = por %p26, %p27
    %p29 = scmp.ne.s32.totalorder %s21, %s24
    %p30 = scmp.eq.s32.totalorder %s11, 0
    %p31 = por %p29, %p30
    %p32 = scmp.ne.s32.totalorder %s21, %s24
    %p33 = scmp.eq.s32.totalorder %s16, 1
    %p34 = por %p32, %p33
    %p35 = scmp.ne.s32.totalorder %s24, %s25
    %p36 = scmp.eq.s32.totalorder %s16, 0
    %p37 = por %p35, %p36
    %p38 = scmp.ne.s32.totalorder %s24, %s25
    %p39 = scmp.eq.s32.totalorder %s17, 1
    %p40 = por %p38, %p39
    %p42 = scmp.ne.s32.totalorder %s25, %s41
    %p43 = scmp.eq.s32.totalorder %s17, 0
    %p44 = por %p42, %p43
    %s45 = ssub.s32 %s11, %s18
    %p46 = scmp.eq.s32.totalorder %s45, 0
    %s48 = sadd.s32 %s47, 1
    %s49 = scalar_select %p46, %s47, %s48
    %p52 = pneg %p46
    %p53 = scmp.eq.s32.totalorder %s11, 1
    %p54 = por %p52, %p53
    %p55 = scmp.ne.s32.totalorder %s47, %s50
    %p56 = scmp.eq.s32.totalorder %s11, 0
    %p57 = por %p55, %p56
    %p58 = scmp.ne.s32.totalorder %s47, %s50
    %p59 = scmp.eq.s32.totalorder %s16, 1
    %p60 = por %p58, %p59
    %p61 = scmp.ne.s32.totalorder %s50, %s51
    %p62 = scmp.eq.s32.totalorder %s16, 0
    %p63 = por %p61, %p62
    %p64 = scmp.ne.s32.totalorder %s50, %s51
    %p65 = scmp.eq.s32.totalorder %s17, 1
    %p66 = por %p64, %p65
    %p68 = scmp.ne.s32.totalorder %s51, %s67
    %p69 = scmp.eq.s32.totalorder %s17, 0
    %p70 = por %p68, %p69
    %s72 = sadd.s32 %s71, 1
    %p75 = scmp.eq.s32.totalorder %s11, 1
    %p76 = scmp.ne.s32.totalorder %s71, %s73
    %p77 = scmp.eq.s32.totalorder %s11, 0
    %p78 = por %p76, %p77
    %p79 = scmp.ne.s32.totalorder %s71, %s73
    %p80 = scmp.eq.s32.totalorder %s16, 1
    %p81 = por %p79, %p80
    %p82 = scmp.ne.s32.totalorder %s73, %s74
    %p83 = scmp.eq.s32.totalorder %s16, 0
    %p84 = por %p82, %p83
    %p85 = scmp.ne.s32.totalorder %s73, %s74
    %p86 = scmp.eq.s32.totalorder %s17, 1
    %p87 = por %p85, %p86
    %p89 = scmp.ne.s32.totalorder %s74, %s88
    %p90 = scmp.eq.s32.totalorder %s17, 0
    %p91 = por %p89, %p90
    %s93 = sadd.s32 %s92, 1
    %p96 = scmp.eq.s32.totalorder %s11, 1
    %p97 = scmp.ne.s32.totalorder %s92, %s94
    %p98 = scmp.eq.s32.totalorder %s11, 0
    %p99 = por %p97, %p98
    %p100 = scmp.ne.s32.totalorder %s92, %s94
    %p101 = scmp.eq.s32.totalorder %s16, 1
    %p102 = por %p100, %p101
    %p103 = scmp.ne.s32.totalorder %s94, %s95
    %p104 = scmp.eq.s32.totalorder %s16, 0
    %p105 = por %p103, %p104
    %p106 = scmp.ne.s32.totalorder %s94, %s95
    %p107 = scmp.eq.s32.totalorder %s17, 1
    %p108 = por %p106, %p107
    %p110 = scmp.ne.s32.totalorder %s95, %s109
    %p111 = scmp.eq.s32.totalorder %s17, 0
    %p112 = por %p110, %p111
    %s114 = sadd.s32 %s113, 1
    %p117 = scmp.eq.s32.totalorder %s11, 1
    %p118 = scmp.ne.s32.totalorder %s113, %s115
    %p119 = scmp.eq.s32.totalorder %s11, 0
    %p120 = por %p118, %p119
    %p121 = scmp.ne.s32.totalorder %s113, %s115
    %p122 = scmp.eq.s32.totalorder %s16, 1
    %p123 = por %p121, %p122
    %p124 = scmp.ne.s32.totalorder %s115, %s116
    %p125 = scmp.eq.s32.totalorder %s16, 0
    %p126 = por %p124, %p125
    %p127 = scmp.ne.s32.totalorder %s115, %s116
    %p128 = scmp.eq.s32.totalorder %s17, 1
    %p129 = por %p127, %p128
    %p131 = scmp.ne.s32.totalorder %s116, %s130
    %p132 = scmp.eq.s32.totalorder %s17, 0
    %p133 = por %p131, %p132
    %s134 = ssub.s32 %s11, %s18
    %p135 = scmp.eq.s32.totalorder %s134, 0
    %s137 = sadd.s32 %s136, 1
    %s138 = scalar_select %p135, %s136, %s137
    %p141 = pneg %p135
    %p142 = scmp.eq.s32.totalorder %s11, 1
    %p143 = por %p141, %p142
    %p144 = scmp.ne.s32.totalorder %s136, %s139
    %p145 = scmp.eq.s32.totalorder %s11, 0
    %p146 = por %p144, %p145
    %p147 = scmp.ne.s32.totalorder %s136, %s139
    %p148 = scmp.eq.s32.totalorder %s16, 1
    %p149 = por %p147, %p148
    %p150 = scmp.ne.s32.totalorder %s139, %s140
    %p151 = scmp.eq.s32.totalorder %s16, 0
    %p152 = por %p150, %p151
    %p153 = scmp.ne.s32.totalorder %s139, %s140
    %p154 = scmp.eq.s32.totalorder %s17, 1
    %p155 = por %p153, %p154
    %p157 = scmp.ne.s32.totalorder %s140, %s156
    %p158 = scmp.eq.s32.totalorder %s17, 0
    %p159 = por %p157, %p158
    %p160 = scmp.le.s32.totalorder 1, %s11
    %p161 = scmp.lt.s32.totalorder %s11, 3
    %p162 = pnand %p160, %p161
    %p163 = pneg %p162
    // Predicated region
    $region9: #{conditional_linear.1} parent=5 // pred_check
      _
    $region10: #{conditional_linear.1} parent=5 // pred_check_branch
      %165 = sbr.rel (%p162) target = $region12
    $region11: #{conditional_linear.1} parent=5 // pred_region
      %s166 = ssub.s32 %s11, 1
      // Predicated region
      $region13: #{conditional_linear.1} parent=11 // pred_check
        %p167 = pneg %p84
      $region14: #{conditional_linear.1} parent=11 // pred_check_branch
        %169 = sbr.rel (%p167) target = $region16
      $region15: #{conditional_linear.1} parent=11 // pred_region
        _
      $region16: #{conditional_linear.1} parent=11 // pred_fallthru
        _
      // Predicated region
      $region17: #{conditional_linear.1} parent=11 // pred_check
        %p170 = pneg %p105
      $region18: #{conditional_linear.1} parent=11 // pred_check_branch
        %172 = sbr.rel (%p170) target = $region20
      $region19: #{conditional_linear.1} parent=11 // pred_region
        _
      $region20: #{conditional_linear.1} parent=11 // pred_fallthru
        _
      // Predicated region
      $region21: #{conditional_linear.1} parent=11 // pred_check
        %p173 = pneg %p126
      $region22: #{conditional_linear.1} parent=11 // pred_check_branch
        %175 = sbr.rel (%p173) target = $region24
      $region23: #{conditional_linear.1} parent=11 // pred_region
        _
      $region24: #{conditional_linear.1} parent=11 // pred_fallthru
        _
    $region12: #{conditional_linear.1} parent=5 // pred_fallthru
      _
    %p176 = scmp.lt.s32.totalorder %s11, 2
    // Predicated region
    $region25: #{conditional_linear.1} parent=5 // pred_check
      %p177 = pneg %p176
    $region26: #{conditional_linear.1} parent=5 // pred_check_branch
      %179 = sbr.rel (%p177) target = $region28
    $region27: #{conditional_linear.1} parent=5 // pred_region
      // Predicated region
      $region29: #{conditional_linear.1} parent=27 // pred_check
        %p180 = pneg %p31
      $region30: #{conditional_linear.1} parent=27 // pred_check_branch
        %182 = sbr.rel (%p180) target = $region32
      $region31: #{conditional_linear.1} parent=27 // pred_region
        %p183 = scmp.lt.s32.totalorder %s11, 1
        %s184 = scalar_select %p183, %s11, 1
        %s185 = smul.addr %s184, 8
        %s186 = scalar_lea.vmem %s0, %s185
      $region32: #{conditional_linear.1} parent=27 // pred_fallthru
        _
      // Predicated region
      $region33: #{conditional_linear.1} parent=27 // pred_check
        %p187 = pneg %p57
      $region34: #{conditional_linear.1} parent=27 // pred_check_branch
        %189 = sbr.rel (%p187) target = $region36
      $region35: #{conditional_linear.1} parent=27 // pred_region
        %p190 = scmp.lt.s32.totalorder %s11, 1
        %s191 = scalar_select %p190, %s11, 1
        %s192 = smul.addr %s191, 8
        %s193 = scalar_lea.vmem %s1, %s192
      $region36: #{conditional_linear.1} parent=27 // pred_fallthru
        _
    $region28: #{conditional_linear.1} parent=5 // pred_fallthru
      _
    %p194 = scmp.le.s32.totalorder 1, %s11
    %p195 = scmp.lt.s32.totalorder %s11, 3
    %p196 = pnand %p194, %p195
    %p197 = pneg %p196
    // Predicated region
    $region37: #{conditional_linear.1} parent=5 // pred_check
      _
    $region38: #{conditional_linear.1} parent=5 // pred_check_branch
      %199 = sbr.rel (%p196) target = $region40
    $region39: #{conditional_linear.1} parent=5 // pred_region
      %s200 = ssub.s32 %s11, 1
      %p201 = scmp.lt.s32.totalorder %s16, 1
      %s202 = scalar_select %p201, %s16, 1
      %s203 = smul.addr %s202, 8
      %s204 = scalar_lea.vmem %s0, %s203
      %p205 = pneg %p37
      %p206 = pneg %p34
      %p207 = scmp.lt.s32.totalorder %s16, 1
      %s208 = scalar_select %p207, %s16, 1
      %s209 = smul.addr %s208, 8
      %s210 = scalar_lea.vmem %s1, %s209
      %p211 = pneg %p63
      %p212 = pneg %p60
      %p213 = pneg %p84
      %p214 = pneg %p81
      %p215 = pneg %p105
      %p216 = pneg %p102
      %p217 = pneg %p126
      %p218 = pneg %p123
      %p219 = pneg %p152
      %p220 = pneg %p149
      %p221 = scmp.lt.s32.totalorder %s16, 1
      %s222 = scalar_select %p221, %s16, 1
      %s223 = smul.addr %s222, 8
      %s224 = scalar_lea.vmem %s5, %s223
      %p225 = scmp.lt.s32.totalorder %s16, 1
      %s226 = scalar_select %p225, %s16, 1
      %s227 = smul.addr %s226, 8
      %s228 = scalar_lea.vmem %s0, %s227
      %p229 = scmp.lt.s32.totalorder %s16, 1
      %s230 = scalar_select %p229, %s16, 1
      %s231 = smul.addr %s230, 8
      %s232 = scalar_lea.vmem %s1, %s231
      %p233 = scmp.lt.s32.totalorder %s16, 1
      %s234 = scalar_select %p233, %s16, 1
      %s235 = smul.addr %s234, 8
      %s236 = scalar_lea.vmem %s5, %s235
      %v237 = vld [vmem:[%s232] sm:$0xff]
      %v238 = vld [vmem:[%s2] sm:$0xff]
      %v239 = vld [vmem:[%s2 + $0x8] sm:$0xff]
      %v240 = vld [vmem:[%s2 + $0x10] sm:$0xff]
      %v241 = vld [vmem:[%s2 + $0x18] sm:$0xff]
      %v242 = vld [vmem:[%s2 + $0x20] sm:$0xff]
      %v243 = vld [vmem:[%s2 + $0x28] sm:$0xff]
      %v244 = vld [vmem:[%s2 + $0x30] sm:$0xff]
      %v245 = vld [vmem:[%s2 + $0x38] sm:$0xff]
      %v246 = vld [vmem:[%s2 + $0x40] sm:$0xff]
      %v247 = vld [vmem:[%s2 + $0x48] sm:$0xff]
      %v248 = vld [vmem:[%s2 + $0x50] sm:$0xff]
      %v249 = vld [vmem:[%s2 + $0x58] sm:$0xff]
      %v250 = vld [vmem:[%s2 + $0x60] sm:$0xff]
      %v251 = vld [vmem:[%s2 + $0x68] sm:$0xff]
      %v252 = vld [vmem:[%s2 + $0x70] sm:$0xff]
      %v253 = vld [vmem:[%s2 + $0x78] sm:$0xff]
      %v254 = vld [vmem:[%s3] sm:$0x1]
      %v256 = vlaneseq
      %v257 = vshrl.u32 %v256, 7
      %v258 = vsub.s32 0, %v257
      %v259 = vrot.slane %v254, %v258
      %261 = vmatprep.subr.mxu0 0.0
      %262 = vmatpush1.msra.mxu0 %v238
      %263 = vmatprep.subr.mxu0 0.0
      %264 = vmatpush1.msra.mxu0 %v239
      %265 = vmatprep.subr.mxu0 0.0
      %266 = vmatpush1.msra.mxu0 %v240
      %267 = vmatprep.subr.mxu0 0.0
      %268 = vmatpush1.msra.mxu0 %v241
      %269 = vmatprep.subr.mxu0 0.0
      %270 = vmatpush1.msra.mxu0 %v242
      %271 = vmatprep.subr.mxu0 0.0
      %272 = vmatpush1.msra.mxu0 %v243
      %273 = vmatprep.subr.mxu0 0.0
      %274 = vmatpush1.msra.mxu0 %v244
      %275 = vmatprep.subr.mxu0 0.0
      %276 = vmatpush1.msra.mxu0 %v245
      %277 = vmatprep.subr.mxu0 0.0
      %278 = vmatpush1.msra.mxu0 %v246
      %279 = vmatprep.subr.mxu0 0.0
      %280 = vmatpush1.msra.mxu0 %v247
      %281 = vmatprep.subr.mxu0 0.0
      %282 = vmatpush1.msra.mxu0 %v248
      %283 = vmatprep.subr.mxu0 0.0
      %284 = vmatpush1.msra.mxu0 %v249
      %285 = vmatprep.subr.mxu0 0.0
      %286 = vmatpush1.msra.mxu0 %v250
      %287 = vmatprep.subr.mxu0 0.0
      %288 = vmatpush1.msra.mxu0 %v251
      %289 = vmatprep.subr.mxu0 0.0
      %290 = vmatpush1.msra.mxu0 %v252
      %291 = vmatprep.subr.mxu0 0.0
      %292 = vmatpush1.msra.mxu0 %v253
      %293 = vmatprep.subr.mxu0 0.0
      %294 = vmatpush1.msra.mxu0 0.0
      %295 = vmatprep.subr.mxu0 0.0
      %296 = vmatpush1.msra.mxu0 0.0
      %297 = vmatprep.subr.mxu0 0.0
      %298 = vmatpush1.msra.mxu0 0.0
      %299 = vmatprep.subr.mxu0 0.0
      %300 = vmatpush1.msra.mxu0 0.0
      %301 = vmatprep.subr.mxu0 0.0
      %302 = vmatpush1.msra.mxu0 0.0
      %303 = vmatprep.subr.mxu0 0.0
      %304 = vmatpush1.msra.mxu0 0.0
      %305 = vmatprep.subr.mxu0 0.0
      %306 = vmatpush1.msra.mxu0 0.0
      %307 = vmatprep.subr.mxu0 0.0
      %308 = vmatpush1.msra.mxu0 0.0
      %309 = vmatprep.subr.mxu0 0.0
      %310 = vmatpush1.msra.mxu0 0.0
      %311 = vmatprep.subr.mxu0 0.0
      %312 = vmatpush1.msra.mxu0 0.0
      %313 = vmatprep.subr.mxu0 0.0
      %314 = vmatpush1.msra.mxu0 0.0
      %315 = vmatprep.subr.mxu0 0.0
      %316 = vmatpush1.msra.mxu0 0.0
      %317 = vmatprep.subr.mxu0 0.0
      %318 = vmatpush1.msra.mxu0 0.0
      %319 = vmatprep.subr.mxu0 0.0
      %320 = vmatpush1.msra.mxu0 0.0
      %321 = vmatprep.subr.mxu0 0.0
      %322 = vmatpush1.msra.mxu0 0.0
      %323 = vmatprep.subr.mxu0 0.0
      %324 = vmatpush1.msra.mxu0 0.0
      %325 = vmatprep.mubr.f32.mxu0 0.0
      %326 = vmatmul.mubr.f32.gmra.mrb[0].mxu0 %v237
      %v327 = vpop.f32.mrb[0].mxu0
      %v328 = vadd.f32 %v259, %v327
      %v329 = vpop.f32.mrb[0].mxu0
      %330 = vdwg.mxu0
      %v331 = vlaneseq
      %v332 = vand.u32 %v331, 127
      %v333 = vld [vmem:[%s228] sm:$0xff]
      %vm334 = vcmp.ge.s32.totalorder %v333, 0
      %vm335 = vcmp.lt.s32.totalorder %v333, 10
      %vm336 = vmand %vm334, %vm335
      %v337 = vsel %vm336, %v333, 4294967295
      %338 = vset.pattern.permute.xlu0 0
      %339 = vperm.xlu0 %338, %v337
      %v340 = vpop.permute.xlu0 %339
      %vm341 = vcmp.eq.s32.totalorder %v332, %v340
      %v342 = vsel %vm341, 1, 0
      %v343 = vcvt.s32.f32 %v342
      %v344 = vadd.f32 %v343, 0.0
      %v345 = vadd.s32 %v333, 16
      %v346 = vsel %vm336, %v345, 4294967295
      %347 = vset.pattern.permute.xlu0 1
      %348 = vperm.xlu0 %347, %v346
      %v349 = vpop.permute.xlu0 %348
      %vm350 = vcmp.eq.s32.totalorder %v332, %v349
      %v351 = vsel %vm350, 1, 0
      %v352 = vcvt.s32.f32 %v351
      %v353 = vadd.f32 %v344, %v352
      %v354 = vadd.s32 %v333, 32
      %v355 = vsel %vm336, %v354, 4294967295
      %356 = vset.pattern.permute.xlu0 2
      %357 = vperm.xlu0 %356, %v355
      %v358 = vpop.permute.xlu0 %357
      %vm359 = vcmp.eq.s32.totalorder %v332, %v358
      %v360 = vsel %vm359, 1, 0
      %v361 = vcvt.s32.f32 %v360
      %v362 = vadd.f32 %v353, %v361
      %v363 = vadd.s32 %v333, 48
      %v364 = vsel %vm336, %v363, 4294967295
      %365 = vset.pattern.permute.xlu0 3
      %366 = vperm.xlu0 %365, %v364
      %v367 = vpop.permute.xlu0 %366
      %vm368 = vcmp.eq.s32.totalorder %v332, %v367
      %v369 = vsel %vm368, 1, 0
      %v370 = vcvt.s32.f32 %v369
      %v371 = vadd.f32 %v362, %v370
      %v372 = vld [vmem:[%s4] sm:$0xff]
      %v373 = vld [vmem:[%s4 + $0x8] sm:$0xff]
      %v374 = vld [vmem:[%s4 + $0x10] sm:$0xff]
      %v375 = vld [vmem:[%s4 + $0x18] sm:$0xff]
      %v376 = vld [vmem:[%s4 + $0x20] sm:$0xff]
      %v377 = vld [vmem:[%s4 + $0x28] sm:$0xff]
      %v378 = vld [vmem:[%s4 + $0x30] sm:$0xff]
      %v379 = vld [vmem:[%s4 + $0x38] sm:$0xff]
      %vm380 = vcmask 523264
      %v382 = vsel %vm380, %v371, 0
      %384 = vmatprep.subr.mxu0 0.0
      %385 = vmatpush1.msra.mxu0 %v372
      %386 = vmatprep.subr.mxu0 0.0
      %387 = vmatpush1.msra.mxu0 %v373
      %388 = vmatprep.subr.mxu0 0.0
      %389 = vmatpush1.msra.mxu0 %v374
      %390 = vmatprep.subr.mxu0 0.0
      %391 = vmatpush1.msra.mxu0 %v375
      %392 = vmatprep.subr.mxu0 0.0
      %393 = vmatpush1.msra.mxu0 %v376
      %394 = vmatprep.subr.mxu0 0.0
      %395 = vmatpush1.msra.mxu0 %v377
      %396 = vmatprep.subr.mxu0 0.0
      %397 = vmatpush1.msra.mxu0 %v378
      %398 = vmatprep.subr.mxu0 0.0
      %399 = vmatpush1.msra.mxu0 %v379
      %400 = vmatprep.subr.mxu0 0.0
      %401 = vmatpush1.msra.mxu0 0.0
      %402 = vmatprep.subr.mxu0 0.0
      %403 = vmatpush1.msra.mxu0 0.0
      %404 = vmatprep.subr.mxu0 0.0
      %405 = vmatpush1.msra.mxu0 0.0
      %406 = vmatprep.subr.mxu0 0.0
      %407 = vmatpush1.msra.mxu0 0.0
      %408 = vmatprep.subr.mxu0 0.0
      %409 = vmatpush1.msra.mxu0 0.0
      %410 = vmatprep.subr.mxu0 0.0
      %411 = vmatpush1.msra.mxu0 0.0
      %412 = vmatprep.subr.mxu0 0.0
      %413 = vmatpush1.msra.mxu0 0.0
      %414 = vmatprep.subr.mxu0 0.0
      %415 = vmatpush1.msra.mxu0 0.0
      %416 = vmatprep.subr.mxu0 0.0
      %417 = vmatpush1.msra.mxu0 0.0
      %418 = vmatprep.subr.mxu0 0.0
      %419 = vmatpush1.msra.mxu0 0.0
      %420 = vmatprep.subr.mxu0 0.0
      %421 = vmatpush1.msra.mxu0 0.0
      %422 = vmatprep.subr.mxu0 0.0
      %423 = vmatpush1.msra.mxu0 0.0
      %424 = vmatprep.subr.mxu0 0.0
      %425 = vmatpush1.msra.mxu0 0.0
      %426 = vmatprep.subr.mxu0 0.0
      %427 = vmatpush1.msra.mxu0 0.0
      %428 = vmatprep.subr.mxu0 0.0
      %429 = vmatpush1.msra.mxu0 0.0
      %430 = vmatprep.subr.mxu0 0.0
      %431 = vmatpush1.msra.mxu0 0.0
      %432 = vmatprep.subr.mxu0 0.0
      %433 = vmatpush1.msra.mxu0 0.0
      %434 = vmatprep.subr.mxu0 0.0
      %435 = vmatpush1.msra.mxu0 0.0
      %436 = vmatprep.subr.mxu0 0.0
      %437 = vmatpush1.msra.mxu0 0.0
      %438 = vmatprep.subr.mxu0 0.0
      %439 = vmatpush1.msra.mxu0 0.0
      %440 = vmatprep.subr.mxu0 0.0
      %441 = vmatpush1.msra.mxu0 0.0
      %442 = vmatprep.subr.mxu0 0.0
      %443 = vmatpush1.msra.mxu0 0.0
      %444 = vmatprep.subr.mxu0 0.0
      %445 = vmatpush1.msra.mxu0 0.0
      %446 = vmatprep.subr.mxu0 0.0
      %447 = vmatpush1.msra.mxu0 0.0
      %448 = vmatprep.mubr.f32.mxu0 0.0
      %449 = vmatmul.mubr.f32.gmra.mrb[0].mxu0 %v382
      %v450 = vpop.f32.mrb[0].mxu0
      %v451 = vadd.f32 0.0, %v450
      %v452 = vpop.f32.mrb[0].mxu0
      %453 = vdwg.mxu0
      %v454 = vmul.f32 %v451, %v328
      %455 = vst [vmem:[%s236] sm:$0xff] %v454
      %p456 = scmp.lt.s32.totalorder %s16, 1
      %s457 = scalar_select %p456, %s16, 1
      %s458 = smul.addr %s457, 8
      %s459 = scalar_lea.vmem %s5, %s458
      // Predicated region
      $region41: #{conditional_linear.1} parent=39 // pred_check
        %p460 = pneg %p149
      $region42: #{conditional_linear.1} parent=39 // pred_check_branch
        %462 = sbr.rel (%p460) target = $region44
      $region43: #{conditional_linear.1} parent=39 // pred_region
        _
      $region44: #{conditional_linear.1} parent=39 // pred_fallthru
        _
    $region40: #{conditional_linear.1} parent=5 // pred_fallthru
      _
    %p463 = scmp.le.s32.totalorder 2, %s11
    // Predicated region
    $region45: #{conditional_linear.1} parent=5 // pred_check
      %p464 = pneg %p463
    $region46: #{conditional_linear.1} parent=5 // pred_check_branch
      %466 = sbr.rel (%p464) target = $region48
    $region47: #{conditional_linear.1} parent=5 // pred_region
      %s467 = ssub.s32 %s11, 2
      // Predicated region
      $region49: #{conditional_linear.1} parent=47 // pred_check
        %p468 = pneg %p155
      $region50: #{conditional_linear.1} parent=47 // pred_check_branch
        %470 = sbr.rel (%p468) target = $region52
      $region51: #{conditional_linear.1} parent=47 // pred_region
        %p471 = scmp.lt.s32.totalorder %s17, 1
        %s472 = scalar_select %p471, %s17, 1
        %s473 = smul.addr %s472, 8
        %s474 = scalar_lea.vmem %s5, %s473
      $region52: #{conditional_linear.1} parent=47 // pred_fallthru
        _
    $region48: #{conditional_linear.1} parent=5 // pred_fallthru
      _
  $region6: #{conditional_linear.1} parent=0 // loop_footer
    %s15 = sadd.s32 1, %s11
  $region7: #{conditional_linear.1} parent=0 // loop_footer_branch
    %10 = sbr.rel target = $region3
  $region8: #{conditional_linear.1} parent=0 // loop_exit
    _

</llo_original>
